<compile_context>
chip_gen: v6e
topology: v6e:2x2x1
jax: 0.10.0
libtpu: 0.0.40
codegen_flags: <defaults>
</compile_context>

<pallas_src>
import jax
import jax.numpy as jnp
from jax.experimental import pallas as pl
from jax.experimental.pallas import tpu as pltpu

NUM_CLASSES = 42
START_FEATURES = 267
NNS = 64
OUT_PAD = 128  # lane-dense padded output width (>= NUM_CLASSES, multiple of 128)


def _round_up(x, m):
    return ((x + m - 1) // m) * m


def _mlp_kernel(x_ref, w1_ref, b1_ref, w2_ref, b2_ref, w3_ref, b3_ref, o_ref):
    # Layer 1: Linear + ReLU (MXU matmul, f32 accumulation; bias kept in f32)
    h1 = jnp.dot(x_ref[...], w1_ref[...], preferred_element_type=jnp.float32)
    h1 = jnp.maximum(h1 + b1_ref[...], 0.0)
    # Layer 2: Linear + ReLU
    h2 = jnp.dot(h1.astype(w2_ref.dtype), w2_ref[...],
                 preferred_element_type=jnp.float32)
    h2 = jnp.maximum(h2 + b2_ref[...], 0.0)
    # Layer 3: Linear (logits), output padded to 128 lanes -> unmasked stores
    out = jnp.dot(h2.astype(w3_ref.dtype), w3_ref[...],
                  preferred_element_type=jnp.float32)
    o_ref[...] = (out + b3_ref[...]).astype(o_ref.dtype)


def acopio_forward(x, params, *, tm=2048, use_bf16=False):
    """Fused MLP forward.

    x: (B, START_FEATURES) float32. Returns (B, NUM_CLASSES) float32.
    tm: batch tile (rows per grid step). Tune per chip:
        v5e ~1024-2048, v6e ~2048-4096, v7x ~4096-8192 (keep B/tm >= 2 on v7x).
    use_bf16: cast x and weights to bf16 for the matmuls (f32 accumulation).
    """
    w1, b1, w2, b2, w3, b3 = params
    B, F = x.shape
    assert F == START_FEATURES

    compute_dtype = jnp.bfloat16 if use_bf16 else jnp.float32

    # --- lane-dense output: zero-pad W3/b3 to OUT_PAD columns ---------------
    w3p = jnp.pad(w3, ((0, 0), (0, OUT_PAD - NUM_CLASSES)))
    b3p = jnp.pad(b3, ((0, 0), (0, OUT_PAD - NUM_CLASSES)))

    # Cast streamed/matmul operands; keep biases in f32 (tiny, adds accuracy).
    xc = x.astype(compute_dtype)
    w1c = w1.astype(compute_dtype)
    w2c = w2.astype(compute_dtype)
    w3c = w3p.astype(compute_dtype)

    # --- pick an effective batch tile and pad the batch to a multiple of it -
    tm_eff = min(tm, _round_up(B, 8))
    tm_eff = _round_up(tm_eff, 8)
    B_pad = _round_up(B, tm_eff)
    if B_pad != B:
        xc = jnp.pad(xc, ((0, B_pad - B), (0, 0)))

    grid = (B_pad // tm_eff,)

    # --- VMEM budget: only raise the scoped limit if the tiles demand it ----
    x_item = jnp.dtype(compute_dtype).itemsize
    est_vmem = (
        2 * tm_eff * (START_FEATURES * x_item + OUT_PAD * 4)  # double-buffered x/out
        + (START_FEATURES * NNS + NNS * NNS + NNS * OUT_PAD) * x_item  # weights
        + 3 * OUT_PAD * 4  # biases
    )
    compiler_kwargs = dict(dimension_semantics=("parallel",))
    if est_vmem > (30 << 20):
        compiler_kwargs["vmem_limit_bytes"] = min(est_vmem + (4 << 20), 100 << 20)

    out_padded = pl.pallas_call(
        _mlp_kernel,
        out_shape=jax.ShapeDtypeStruct((B_pad, OUT_PAD), jnp.float32),
        grid_spec=pl.GridSpec(
            grid=grid,
            in_specs=[
                pl.BlockSpec((tm_eff, START_FEATURES), lambda i: (i, 0)),  # x tile
                pl.BlockSpec((START_FEATURES, NNS), lambda i: (0, 0)),     # W1 (resident)
                pl.BlockSpec((1, NNS), lambda i: (0, 0)),                  # b1
                pl.BlockSpec((NNS, NNS), lambda i: (0, 0)),                # W2
                pl.BlockSpec((1, NNS), lambda i: (0, 0)),                  # b2
                pl.BlockSpec((NNS, OUT_PAD), lambda i: (0, 0)),            # W3 (padded)
                pl.BlockSpec((1, OUT_PAD), lambda i: (0, 0)),              # b3 (padded)
            ],
            out_specs=pl.BlockSpec((tm_eff, OUT_PAD), lambda i: (i, 0)),
        ),
        compiler_params=pltpu.CompilerParams(**compiler_kwargs),
    )(xc, w1c, b1, w2c, b2, w3c, b3p)

    # Strip batch padding and the lane padding (pad columns are exactly zero-weighted).
    return out_padded[:B, :NUM_CLASSES]


def init_params(key):
    """Deterministic parameter init matching the PyTorch module's shapes.
    PyTorch nn.Linear stores weight as (out, in); we store the transpose (in, out)."""
    k1, k2, k3, k4, k5, k6 = jax.random.split(key, 6)

    def uinit(k, fan_in, shape):
        bound = 1.0 / jnp.sqrt(fan_in)
        return jax.random.uniform(k, shape, jnp.float32, -bound, bound)

    w1 = uinit(k1, START_FEATURES, (START_FEATURES, NNS))
    b1 = uinit(k2, START_FEATURES, (1, NNS))
    w2 = uinit(k3, NNS, (NNS, NNS))
    b2 = uinit(k4, NNS, (1, NNS))
    w3 = uinit(k5, NNS, (NNS, NUM_CLASSES))
    b3 = uinit(k6, NNS, (1, NUM_CLASSES))
    return (w1, b1, w2, b2, w3, b3)


def reference_forward(x, params):
    w1, b1, w2, b2, w3, b3 = params
    h1 = jnp.maximum(x @ w1 + b1, 0.0)
    h2 = jnp.maximum(h1 @ w2 + b2, 0.0)
    return h2 @ w3 + b3


if __name__ == "__main__":
    key = jax.random.PRNGKey(0)
    kx, kp = jax.random.split(key)

    batch = 16
    x = jax.random.normal(kx, (batch, START_FEATURES), jnp.float32)
    params = init_params(kp)

    ref = reference_forward(x, params)

    # f32 path: exact-tolerance check vs the JAX reference.
    out = jax.block_until_ready(acopio_forward(x, params))
    assert out.shape == (batch, NUM_CLASSES)
    assert jnp.allclose(out, ref, atol=1e-4, rtol=1e-4), "f32 mismatch vs JAX reference"

    # bf16 fast path (halves streamed HBM bytes); looser tolerance by construction.
    out_bf16 = jax.block_until_ready(acopio_forward(x, params, use_bf16=True))
    assert out_bf16.shape == (batch, NUM_CLASSES)
    assert jnp.allclose(out_bf16, ref, atol=1e-1, rtol=1e-1), "bf16 mismatch vs JAX reference"

    print("KERNEL_OK")
</pallas_src>

<mosaic_0001>
module attributes {stable_mosaic.version = 11 : i64} {
  func.func @_mlp_kernel(%arg0: i32, %arg1: memref<16x267xf32, #tpu.memory_space<vmem>>, %arg2: memref<267x64xf32, #tpu.memory_space<vmem>>, %arg3: memref<1x64xf32, #tpu.memory_space<vmem>>, %arg4: memref<64x64xf32, #tpu.memory_space<vmem>>, %arg5: memref<1x64xf32, #tpu.memory_space<vmem>>, %arg6: memref<64x128xf32, #tpu.memory_space<vmem>>, %arg7: memref<1x128xf32, #tpu.memory_space<vmem>>, %arg8: memref<16x128xf32, #tpu.memory_space<vmem>>) attributes {dimension_semantics = [#tpu.dimension_semantics<parallel>], iteration_bounds = array<i64: 1>, scalar_prefetch = 0 : i64, scratch_operands = 0 : i64, tpu.core_type = #tpu.core_type<tc>, window_params = [{transform_indices = @transform_0, window_bounds = array<i64: 16, 267>}, {pipeline_mode = #tpu.pipeline_mode<synchronous>, transform_indices = @transform_1, window_bounds = array<i64: 267, 64>}, {pipeline_mode = #tpu.pipeline_mode<synchronous>, transform_indices = @transform_2, window_bounds = array<i64: 1, 64>}, {pipeline_mode = #tpu.pipeline_mode<synchronous>, transform_indices = @transform_3, window_bounds = array<i64: 64, 64>}, {pipeline_mode = #tpu.pipeline_mode<synchronous>, transform_indices = @transform_4, window_bounds = array<i64: 1, 64>}, {pipeline_mode = #tpu.pipeline_mode<synchronous>, transform_indices = @transform_5, window_bounds = array<i64: 64, 128>}, {pipeline_mode = #tpu.pipeline_mode<synchronous>, transform_indices = @transform_6, window_bounds = array<i64: 1, 128>}, {transform_indices = @transform_7, window_bounds = array<i64: 16, 128>}]} {
    %c0 = arith.constant 0 : index
    %c0_0 = arith.constant 0 : index
    %0 = vector.load %arg1[%c0, %c0_0] : memref<16x267xf32, #tpu.memory_space<vmem>>, vector<16x267xf32>
    %c0_1 = arith.constant 0 : index
    %c0_2 = arith.constant 0 : index
    %1 = vector.load %arg2[%c0_1, %c0_2] : memref<267x64xf32, #tpu.memory_space<vmem>>, vector<267x64xf32>
    %cst = arith.constant dense<0.000000e+00> : vector<16x64xf32>
    %2 = tpu.matmul %0, %1, %cst {dimension_numbers = #tpu.dot_dimension_numbers<[1], [0], [0], [1], [0, 0, 1, 1], [], []>} : vector<16x267xf32>, vector<267x64xf32>, vector<16x64xf32> -> vector<16x64xf32>
    %c0_3 = arith.constant 0 : index
    %c0_4 = arith.constant 0 : index
    %3 = vector.load %arg3[%c0_3, %c0_4] : memref<1x64xf32, #tpu.memory_space<vmem>>, vector<1x64xf32>
    %4 = vector.broadcast %3 : vector<1x64xf32> to vector<16x64xf32>
    %5 = arith.addf %2, %4 : vector<16x64xf32>
    %cst_5 = arith.constant 0.000000e+00 : f32
    %6 = vector.broadcast %cst_5 : f32 to vector<16x64xf32>
    %7 = arith.maximumf %5, %6 : vector<16x64xf32>
    %c0_6 = arith.constant 0 : index
    %c0_7 = arith.constant 0 : index
    %8 = vector.load %arg4[%c0_6, %c0_7] : memref<64x64xf32, #tpu.memory_space<vmem>>, vector<64x64xf32>
    %cst_8 = arith.constant dense<0.000000e+00> : vector<16x64xf32>
    %9 = tpu.matmul %7, %8, %cst_8 {dimension_numbers = #tpu.dot_dimension_numbers<[1], [0], [0], [1], [0, 0, 1, 1], [], []>} : vector<16x64xf32>, vector<64x64xf32>, vector<16x64xf32> -> vector<16x64xf32>
    %c0_9 = arith.constant 0 : index
    %c0_10 = arith.constant 0 : index
    %10 = vector.load %arg5[%c0_9, %c0_10] : memref<1x64xf32, #tpu.memory_space<vmem>>, vector<1x64xf32>
    %11 = vector.broadcast %10 : vector<1x64xf32> to vector<16x64xf32>
    %12 = arith.addf %9, %11 : vector<16x64xf32>
    %cst_11 = arith.constant 0.000000e+00 : f32
    %13 = vector.broadcast %cst_11 : f32 to vector<16x64xf32>
    %14 = arith.maximumf %12, %13 : vector<16x64xf32>
    %c0_12 = arith.constant 0 : index
    %c0_13 = arith.constant 0 : index
    %15 = vector.load %arg6[%c0_12, %c0_13] : memref<64x128xf32, #tpu.memory_space<vmem>>, vector<64x128xf32>
    %cst_14 = arith.constant dense<0.000000e+00> : vector<16x128xf32>
    %16 = tpu.matmul %14, %15, %cst_14 {dimension_numbers = #tpu.dot_dimension_numbers<[1], [0], [0], [1], [0, 0, 1, 1], [], []>} : vector<16x64xf32>, vector<64x128xf32>, vector<16x128xf32> -> vector<16x128xf32>
    %c0_15 = arith.constant 0 : index
    %c0_16 = arith.constant 0 : index
    %17 = vector.load %arg7[%c0_15, %c0_16] : memref<1x128xf32, #tpu.memory_space<vmem>>, vector<1x128xf32>
    %18 = vector.broadcast %17 : vector<1x128xf32> to vector<16x128xf32>
    %19 = arith.addf %16, %18 : vector<16x128xf32>
    %c0_17 = arith.constant 0 : index
    %c0_18 = arith.constant 0 : index
    %20 = vector.load %arg8[%c0_17, %c0_18] : memref<16x128xf32, #tpu.memory_space<vmem>>, vector<16x128xf32>
    tpu.vector_store %arg8[%c0_17, %c0_18], %19 {strides = array<i32>} : memref<16x128xf32, #tpu.memory_space<vmem>>, vector<16x128xf32>,
    return
  }
  func.func @transform_0(%arg0: i32) -> (i32, i32) {
    %c0_i32 = arith.constant 0 : i32
    %c0_i32_0 = arith.constant 0 : i32
    return %arg0, %c0_i32 : i32, i32
  }
  func.func @transform_1(%arg0: i32) -> (i32, i32) {
    %c0_i32 = arith.constant 0 : i32
    %c0_i32_0 = arith.constant 0 : i32
    %c0_i32_1 = arith.constant 0 : i32
    return %c0_i32, %c0_i32_0 : i32, i32
  }
  func.func @transform_2(%arg0: i32) -> (i32, i32) {
    %c0_i32 = arith.constant 0 : i32
    %c0_i32_0 = arith.constant 0 : i32
    %c0_i32_1 = arith.constant 0 : i32
    return %c0_i32, %c0_i32_0 : i32, i32
  }
  func.func @transform_3(%arg0: i32) -> (i32, i32) {
    %c0_i32 = arith.constant 0 : i32
    %c0_i32_0 = arith.constant 0 : i32
    %c0_i32_1 = arith.constant 0 : i32
    return %c0_i32, %c0_i32_0 : i32, i32
  }
  func.func @transform_4(%arg0: i32) -> (i32, i32) {
    %c0_i32 = arith.constant 0 : i32
    %c0_i32_0 = arith.constant 0 : i32
    %c0_i32_1 = arith.constant 0 : i32
    return %c0_i32, %c0_i32_0 : i32, i32
  }
  func.func @transform_5(%arg0: i32) -> (i32, i32) {
    %c0_i32 = arith.constant 0 : i32
    %c0_i32_0 = arith.constant 0 : i32
    %c0_i32_1 = arith.constant 0 : i32
    return %c0_i32, %c0_i32_0 : i32, i32
  }
  func.func @transform_6(%arg0: i32) -> (i32, i32) {
    %c0_i32 = arith.constant 0 : i32
    %c0_i32_0 = arith.constant 0 : i32
    %c0_i32_1 = arith.constant 0 : i32
    return %c0_i32, %c0_i32_0 : i32, i32
  }
  func.func @transform_7(%arg0: i32) -> (i32, i32) {
    %c0_i32 = arith.constant 0 : i32
    %c0_i32_0 = arith.constant 0 : i32
    return %arg0, %c0_i32 : i32, i32
  }
}

</mosaic_0001>

<llo_original>
// kernel: tpu_custom_call.1
$region0: #{tpu_custom_call.1}
  #allocation0 [shape = 'u32[]', space=smem, size = 0x4, offset = 0x4, fixed_abs, tag = 'smem constant byte address 0x4 - core index']
  #allocation1 [shape = 'u32[144,128]{1,0:T(1,128)}', space=vmem, size = 0x12000, scoped, tag = 'internal scratch']
  %s0 = inlined_call_operand.vmem [shape: f32[16,267], index: 0, kind: input, shape index: {}]
  %s1 = inlined_call_operand.vmem [shape: f32[267,64], index: 1, kind: input, shape index: {}]
  %s2 = inlined_call_operand.vmem [shape: f32[1,64], index: 2, kind: input, shape index: {}]
  %s3 = inlined_call_operand.vmem [shape: f32[64,64], index: 3, kind: input, shape index: {}]
  %s4 = inlined_call_operand.vmem [shape: f32[1,64], index: 4, kind: input, shape index: {}]
  %s5 = inlined_call_operand.vmem [shape: f32[64,128], index: 5, kind: input, shape index: {}]
  %s6 = inlined_call_operand.vmem [shape: f32[1,128], index: 6, kind: input, shape index: {}]
  %s7 = inlined_call_operand.hbm [shape: f32[16,128], index: 7, kind: output, shape index: {}]
  %s8 = sld [smem:[#allocation0]]
  $region38: #{tpu_custom_call.1} parent=0
    _
  %s10 = ssub.s32 1, %s8
  %s11 = scalar_select 0, %s10, %s8
  $region1: #{tpu_custom_call.1} parent=0
    #allocation2 [shape = 'u8[8192]{0}', space=vmem, size = 0x2000, scoped, tag = 'output window, operand 0, single buffered']
    #allocation3 [shape = 's32[1]{0}', space=sflag, size = 0x4, scoped, tag = 'scoped memory for tpu_custom_call.1']
    %12 = vsyncpa [#allocation3], 0
    // Predicated region
    $region2: #{tpu_custom_call.1} parent=1 // pred_check
      _
    $region3: #{tpu_custom_call.1} parent=1 // pred_check_branch
      %14 = sbr.rel (0) target = $region5
    $region4: #{tpu_custom_call.1} parent=1 // pred_region
      _
    $region5: #{tpu_custom_call.1} parent=1 // pred_fallthru
      _
    // Predicated region
    $region6: #{tpu_custom_call.1} parent=1 // pred_check
      _
    $region7: #{tpu_custom_call.1} parent=1 // pred_check_branch
      %16 = sbr.rel (0) target = $region9
    $region8: #{tpu_custom_call.1} parent=1 // pred_region
      _
    $region9: #{tpu_custom_call.1} parent=1 // pred_fallthru
      _
    // Predicated region
    $region10: #{tpu_custom_call.1} parent=1 // pred_check
      _
    $region11: #{tpu_custom_call.1} parent=1 // pred_check_branch
      %18 = sbr.rel (0) target = $region13
    $region12: #{tpu_custom_call.1} parent=1 // pred_region
      _
    $region13: #{tpu_custom_call.1} parent=1 // pred_fallthru
      _
    // Predicated region
    $region14: #{tpu_custom_call.1} parent=1 // pred_check
      _
    $region15: #{tpu_custom_call.1} parent=1 // pred_check_branch
      %20 = sbr.rel (0) target = $region17
    $region16: #{tpu_custom_call.1} parent=1 // pred_region
      _
    $region17: #{tpu_custom_call.1} parent=1 // pred_fallthru
      _
    // Predicated region
    $region18: #{tpu_custom_call.1} parent=1 // pred_check
      _
    $region19: #{tpu_custom_call.1} parent=1 // pred_check_branch
      %22 = sbr.rel (0) target = $region21
    $region20: #{tpu_custom_call.1} parent=1 // pred_region
      _
    $region21: #{tpu_custom_call.1} parent=1 // pred_fallthru
      _
    // Predicated region
    $region22: #{tpu_custom_call.1} parent=1 // pred_check
      _
    $region23: #{tpu_custom_call.1} parent=1 // pred_check_branch
      %24 = sbr.rel (0) target = $region25
    $region24: #{tpu_custom_call.1} parent=1 // pred_region
      _
    $region25: #{tpu_custom_call.1} parent=1 // pred_fallthru
      _
    // Predicated region
    $region26: #{tpu_custom_call.1} parent=1 // pred_check
      _
    $region27: #{tpu_custom_call.1} parent=1 // pred_check_branch
      %26 = sbr.rel (0) target = $region29
    $region28: #{tpu_custom_call.1} parent=1 // pred_region
      _
    $region29: #{tpu_custom_call.1} parent=1 // pred_fallthru
      _
    %v27 = vld [vmem:[%s0] sm:$0xff]
    %v28 = vld [vmem:[%s0 + $0x8] sm:$0xff]
    %v29 = vld [vmem:[%s0 + $0x10] sm:$0xff]
    %v30 = vld [vmem:[%s0 + $0x18] sm:$0xff]
    %v31 = vld [vmem:[%s0 + $0x20] sm:$0xff]
    %v32 = vld [vmem:[%s0 + $0x28] sm:$0xff]
    %v33 = vld [vmem:[%s1] sm:$0xff]
    %v34 = vld [vmem:[%s1 + $0x8] sm:$0xff]
    %v35 = vld [vmem:[%s1 + $0x10] sm:$0xff]
    %v36 = vld [vmem:[%s1 + $0x18] sm:$0xff]
    %v37 = vld [vmem:[%s1 + $0x20] sm:$0xff]
    %v38 = vld [vmem:[%s1 + $0x28] sm:$0xff]
    %v39 = vld [vmem:[%s1 + $0x30] sm:$0xff]
    %v40 = vld [vmem:[%s1 + $0x38] sm:$0xff]
    %v41 = vld [vmem:[%s1 + $0x40] sm:$0xff]
    %v42 = vld [vmem:[%s1 + $0x48] sm:$0xff]
    %v43 = vld [vmem:[%s1 + $0x50] sm:$0xff]
    %v44 = vld [vmem:[%s1 + $0x58] sm:$0xff]
    %v45 = vld [vmem:[%s1 + $0x60] sm:$0xff]
    %v46 = vld [vmem:[%s1 + $0x68] sm:$0xff]
    %v47 = vld [vmem:[%s1 + $0x70] sm:$0xff]
    %v48 = vld [vmem:[%s1 + $0x78] sm:$0xff]
    %v49 = vld [vmem:[%s1 + $0x80] sm:$0xff]
    %v50 = vld [vmem:[%s1 + $0x88] sm:$0xff]
    %v51 = vld [vmem:[%s1 + $0x90] sm:$0xff]
    %v52 = vld [vmem:[%s1 + $0x98] sm:$0xff]
    %v53 = vld [vmem:[%s1 + $0xa0] sm:$0xff]
    %v54 = vld [vmem:[%s1 + $0xa8] sm:$0xff]
    %v55 = vld [vmem:[%s1 + $0xb0] sm:$0xff]
    %v56 = vld [vmem:[%s1 + $0xb8] sm:$0xff]
    %v57 = vld [vmem:[%s1 + $0xc0] sm:$0xff]
    %v58 = vld [vmem:[%s1 + $0xc8] sm:$0xff]
    %v59 = vld [vmem:[%s1 + $0xd0] sm:$0xff]
    %v60 = vld [vmem:[%s1 + $0xd8] sm:$0xff]
    %v61 = vld [vmem:[%s1 + $0xe0] sm:$0xff]
    %v62 = vld [vmem:[%s1 + $0xe8] sm:$0xff]
    %v63 = vld [vmem:[%s1 + $0xf0] sm:$0xff]
    %v64 = vld [vmem:[%s1 + $0xf8] sm:$0xff]
    %v65 = vld [vmem:[%s1 + $0x100] sm:$0xff]
    %v66 = vld [vmem:[%s1 + $0x108] sm:$0x7]
    %v67 = vld [vmem:[%s2] sm:$0x1]
    %v69 = vlaneseq
    %v70 = vshrl.u32 %v69, 7
    %v71 = vsub.s32 0, %v70
    %v72 = vrot.slane %v67, %v71
    %vm74 = vcmask 89088
    %v76 = vsel %vm74, %v29, 0
    %v79 = vsel %vm74, %v32, 0
    %vm81 = vcmask 1042432
    %v83 = vsel %vm81, %v66, 0
    %85 = vmatprep.subr.mxu0 0.0
    %86 = vmatpush1.msra.mxu0 %v48
    %87 = vmatprep.subr.mxu0 0.0
    %88 = vmatpush1.msra.mxu0 %v47
    %89 = vmatprep.subr.mxu0 0.0
    %90 = vmatpush1.msra.mxu0 %v46
    %91 = vmatprep.subr.mxu0 0.0
    %92 = vmatpush1.msra.mxu0 %v45
    %93 = vmatprep.subr.mxu0 0.0
    %94 = vmatpush1.msra.mxu0 %v44
    %95 = vmatprep.subr.mxu0 0.0
    %96 = vmatpush1.msra.mxu0 %v43
    %97 = vmatprep.subr.mxu0 0.0
    %98 = vmatpush1.msra.mxu0 %v42
    %99 = vmatprep.subr.mxu0 0.0
    %100 = vmatpush1.msra.mxu0 %v41
    %101 = vmatprep.subr.mxu0 0.0
    %102 = vmatpush1.msra.mxu0 %v40
    %103 = vmatprep.subr.mxu0 0.0
    %104 = vmatpush1.msra.mxu0 %v39
    %105 = vmatprep.subr.mxu0 0.0
    %106 = vmatpush1.msra.mxu0 %v38
    %107 = vmatprep.subr.mxu0 0.0
    %108 = vmatpush1.msra.mxu0 %v37
    %109 = vmatprep.subr.mxu0 0.0
    %110 = vmatpush1.msra.mxu0 %v36
    %111 = vmatprep.subr.mxu0 0.0
    %112 = vmatpush1.msra.mxu0 %v35
    %113 = vmatprep.subr.mxu0 0.0
    %114 = vmatpush1.msra.mxu0 %v34
    %115 = vmatprep.subr.mxu0 0.0
    %116 = vmatpush1.msra.mxu0 %v33
    %117 = vmatprep.subr.mxu0 0.0
    %118 = vmatpush2.msra.mxu0 %v64
    %119 = vmatprep.subr.mxu0 0.0
    %120 = vmatpush2.msra.mxu0 %v63
    %121 = vmatprep.subr.mxu0 0.0
    %122 = vmatpush2.msra.mxu0 %v62
    %123 = vmatprep.subr.mxu0 0.0
    %124 = vmatpush2.msra.mxu0 %v61
    %125 = vmatprep.subr.mxu0 0.0
    %126 = vmatpush2.msra.mxu0 %v60
    %127 = vmatprep.subr.mxu0 0.0
    %128 = vmatpush2.msra.mxu0 %v59
    %129 = vmatprep.subr.mxu0 0.0
    %130 = vmatpush2.msra.mxu0 %v58
    %131 = vmatprep.subr.mxu0 0.0
    %132 = vmatpush2.msra.mxu0 %v57
    %133 = vmatprep.subr.mxu0 0.0
    %134 = vmatpush2.msra.mxu0 %v56
    %135 = vmatprep.subr.mxu0 0.0
    %136 = vmatpush2.msra.mxu0 %v55
    %137 = vmatprep.subr.mxu0 0.0
    %138 = vmatpush2.msra.mxu0 %v54
    %139 = vmatprep.subr.mxu0 0.0
    %140 = vmatpush2.msra.mxu0 %v53
    %141 = vmatprep.subr.mxu0 0.0
    %142 = vmatpush2.msra.mxu0 %v52
    %143 = vmatprep.subr.mxu0 0.0
    %144 = vmatpush2.msra.mxu0 %v51
    %145 = vmatprep.subr.mxu0 0.0
    %146 = vmatpush2.msra.mxu0 %v50
    %147 = vmatprep.subr.mxu0 0.0
    %148 = vmatpush2.msra.mxu0 %v49
    %149 = vmatprep.mubr.f32.mxu0 %v28
    %150 = vmatmul.mubr.f32.gmra.mxu0 %v27
    %v151 = vpop.f32.mrf.mxu0
    %v152 = vadd.f32 %v72, %v151
    %v153 = vpop.f32.mrf.mxu0
    %154 = vmatprep.mubr.f32.mxu0 %v31
    %155 = vmatmul.mubr.f32.gmra.mxu0 %v30
    %v156 = vpop.f32.mrf.mxu0
    %v157 = vadd.f32 %v72, %v156
    %v158 = vpop.f32.mrf.mxu0
    %159 = vdwg.mxu0
    %160 = vmatprep.subr.mxu0 0.0
    %161 = vmatpush1.msra.mxu0 0.0
    %162 = vmatprep.subr.mxu0 0.0
    %163 = vmatpush1.msra.mxu0 0.0
    %164 = vmatprep.subr.mxu0 0.0
    %165 = vmatpush1.msra.mxu0 0.0
    %166 = vmatprep.subr.mxu0 0.0
    %167 = vmatpush1.msra.mxu0 0.0
    %168 = vmatprep.subr.mxu0 0.0
    %169 = vmatpush1.msra.mxu0 0.0
    %170 = vmatprep.subr.mxu0 0.0
    %171 = vmatpush1.msra.mxu0 0.0
    %172 = vmatprep.subr.mxu0 0.0
    %173 = vmatpush1.msra.mxu0 0.0
    %174 = vmatprep.subr.mxu0 0.0
    %175 = vmatpush1.msra.mxu0 0.0
    %176 = vmatprep.subr.mxu0 0.0
    %177 = vmatpush1.msra.mxu0 0.0
    %178 = vmatprep.subr.mxu0 0.0
    %179 = vmatpush1.msra.mxu0 0.0
    %180 = vmatprep.subr.mxu0 0.0
    %181 = vmatpush1.msra.mxu0 0.0
    %182 = vmatprep.subr.mxu0 0.0
    %183 = vmatpush1.msra.mxu0 0.0
    %184 = vmatprep.subr.mxu0 0.0
    %185 = vmatpush1.msra.mxu0 0.0
    %186 = vmatprep.subr.mxu0 0.0
    %187 = vmatpush1.msra.mxu0 0.0
    %188 = vmatprep.subr.mxu0 0.0
    %189 = vmatpush1.msra.mxu0 %v83
    %190 = vmatprep.subr.mxu0 0.0
    %191 = vmatpush1.msra.mxu0 %v65
    %192 = vmatprep.subr.mxu0 0.0
    %193 = vmatpush2.msra.mxu0 0.0
    %194 = vmatprep.subr.mxu0 0.0
    %195 = vmatpush2.msra.mxu0 0.0
    %196 = vmatprep.subr.mxu0 0.0
    %197 = vmatpush2.msra.mxu0 0.0
    %198 = vmatprep.subr.mxu0 0.0
    %199 = vmatpush2.msra.mxu0 0.0
    %200 = vmatprep.subr.mxu0 0.0
    %201 = vmatpush2.msra.mxu0 0.0
    %202 = vmatprep.subr.mxu0 0.0
    %203 = vmatpush2.msra.mxu0 0.0
    %204 = vmatprep.subr.mxu0 0.0
    %205 = vmatpush2.msra.mxu0 0.0
    %206 = vmatprep.subr.mxu0 0.0
    %207 = vmatpush2.msra.mxu0 0.0
    %208 = vmatprep.subr.mxu0 0.0
    %209 = vmatpush2.msra.mxu0 0.0
    %210 = vmatprep.subr.mxu0 0.0
    %211 = vmatpush2.msra.mxu0 0.0
    %212 = vmatprep.subr.mxu0 0.0
    %213 = vmatpush2.msra.mxu0 0.0
    %214 = vmatprep.subr.mxu0 0.0
    %215 = vmatpush2.msra.mxu0 0.0
    %216 = vmatprep.subr.mxu0 0.0
    %217 = vmatpush2.msra.mxu0 0.0
    %218 = vmatprep.subr.mxu0 0.0
    %219 = vmatpush2.msra.mxu0 0.0
    %220 = vmatprep.subr.mxu0 0.0
    %221 = vmatpush2.msra.mxu0 0.0
    %222 = vmatprep.subr.mxu0 0.0
    %223 = vmatpush2.msra.mxu0 0.0
    %224 = vmatprep.mubr.f32.mxu0 0.0
    %225 = vmatmul.mubr.f32.gmra.mxu0 %v76
    %v226 = vpop.f32.mrf.mxu0
    %v227 = vadd.f32 %v152, %v226
    %v228 = vpop.f32.mrf.mxu0
    %229 = vmatprep.mubr.f32.mxu0 0.0
    %230 = vmatmul.mubr.f32.gmra.mxu0 %v79
    %v231 = vpop.f32.mrf.mxu0
    %v232 = vadd.f32 %v157, %v231
    %v233 = vpop.f32.mrf.mxu0
    %234 = vdwg.mxu0
    %v235 = vmax.f32 %v227, 0.0
    %v236 = vmax.f32 %v232, 0.0
    %v237 = vld [vmem:[%s3] sm:$0xff]
    %v238 = vld [vmem:[%s3 + $0x8] sm:$0xff]
    %v239 = vld [vmem:[%s3 + $0x10] sm:$0xff]
    %v240 = vld [vmem:[%s3 + $0x18] sm:$0xff]
    %v241 = vld [vmem:[%s3 + $0x20] sm:$0xff]
    %v242 = vld [vmem:[%s3 + $0x28] sm:$0xff]
    %v243 = vld [vmem:[%s3 + $0x30] sm:$0xff]
    %v244 = vld [vmem:[%s3 + $0x38] sm:$0xff]
    %v245 = vld [vmem:[%s4] sm:$0x1]
    %v247 = vlaneseq
    %v248 = vshrl.u32 %v247, 7
    %v249 = vsub.s32 0, %v248
    %v250 = vrot.slane %v245, %v249
    %vm252 = vcmask 523264
    %v254 = vsel %vm252, %v235, 0
    %v257 = vsel %vm252, %v236, 0
    %259 = vmatprep.subr.mxu0 0.0
    %260 = vmatpush1.msra.mxu0 0.0
    %261 = vmatprep.subr.mxu0 0.0
    %262 = vmatpush1.msra.mxu0 0.0
    %263 = vmatprep.subr.mxu0 0.0
    %264 = vmatpush1.msra.mxu0 0.0
    %265 = vmatprep.subr.mxu0 0.0
    %266 = vmatpush1.msra.mxu0 0.0
    %267 = vmatprep.subr.mxu0 0.0
    %268 = vmatpush1.msra.mxu0 0.0
    %269 = vmatprep.subr.mxu0 0.0
    %270 = vmatpush1.msra.mxu0 0.0
    %271 = vmatprep.subr.mxu0 0.0
    %272 = vmatpush1.msra.mxu0 0.0
    %273 = vmatprep.subr.mxu0 0.0
    %274 = vmatpush1.msra.mxu0 0.0
    %275 = vmatprep.subr.mxu0 0.0
    %276 = vmatpush1.msra.mxu0 %v244
    %277 = vmatprep.subr.mxu0 0.0
    %278 = vmatpush1.msra.mxu0 %v243
    %279 = vmatprep.subr.mxu0 0.0
    %280 = vmatpush1.msra.mxu0 %v242
    %281 = vmatprep.subr.mxu0 0.0
    %282 = vmatpush1.msra.mxu0 %v241
    %283 = vmatprep.subr.mxu0 0.0
    %284 = vmatpush1.msra.mxu0 %v240
    %285 = vmatprep.subr.mxu0 0.0
    %286 = vmatpush1.msra.mxu0 %v239
    %287 = vmatprep.subr.mxu0 0.0
    %288 = vmatpush1.msra.mxu0 %v238
    %289 = vmatprep.subr.mxu0 0.0
    %290 = vmatpush1.msra.mxu0 %v237
    %291 = vmatprep.subr.mxu0 0.0
    %292 = vmatpush2.msra.mxu0 0.0
    %293 = vmatprep.subr.mxu0 0.0
    %294 = vmatpush2.msra.mxu0 0.0
    %295 = vmatprep.subr.mxu0 0.0
    %296 = vmatpush2.msra.mxu0 0.0
    %297 = vmatprep.subr.mxu0 0.0
    %298 = vmatpush2.msra.mxu0 0.0
    %299 = vmatprep.subr.mxu0 0.0
    %300 = vmatpush2.msra.mxu0 0.0
    %301 = vmatprep.subr.mxu0 0.0
    %302 = vmatpush2.msra.mxu0 0.0
    %303 = vmatprep.subr.mxu0 0.0
    %304 = vmatpush2.msra.mxu0 0.0
    %305 = vmatprep.subr.mxu0 0.0
    %306 = vmatpush2.msra.mxu0 0.0
    %307 = vmatprep.subr.mxu0 0.0
    %308 = vmatpush2.msra.mxu0 0.0
    %309 = vmatprep.subr.mxu0 0.0
    %310 = vmatpush2.msra.mxu0 0.0
    %311 = vmatprep.subr.mxu0 0.0
    %312 = vmatpush2.msra.mxu0 0.0
    %313 = vmatprep.subr.mxu0 0.0
    %314 = vmatpush2.msra.mxu0 0.0
    %315 = vmatprep.subr.mxu0 0.0
    %316 = vmatpush2.msra.mxu0 0.0
    %317 = vmatprep.subr.mxu0 0.0
    %318 = vmatpush2.msra.mxu0 0.0
    %319 = vmatprep.subr.mxu0 0.0
    %320 = vmatpush2.msra.mxu0 0.0
    %321 = vmatprep.subr.mxu0 0.0
    %322 = vmatpush2.msra.mxu0 0.0
    %323 = vmatprep.mubr.f32.mxu0 0.0
    %324 = vmatmul.mubr.f32.gmra.mxu0 %v254
    %v325 = vpop.f32.mrf.mxu0
    %v326 = vadd.f32 %v250, %v325
    %v327 = vpop.f32.mrf.mxu0
    %328 = vmatprep.mubr.f32.mxu0 0.0
    %329 = vmatmul.mubr.f32.gmra.mxu0 %v257
    %v330 = vpop.f32.mrf.mxu0
    %v331 = vadd.f32 %v250, %v330
    %v332 = vpop.f32.mrf.mxu0
    %333 = vdwg.mxu0
    %v334 = vmax.f32 %v326, 0.0
    %v335 = vmax.f32 %v331, 0.0
    %v336 = vld [vmem:[%s5] sm:$0xff]
    %v337 = vld [vmem:[%s5 + $0x8] sm:$0xff]
    %v338 = vld [vmem:[%s5 + $0x10] sm:$0xff]
    %v339 = vld [vmem:[%s5 + $0x18] sm:$0xff]
    %v340 = vld [vmem:[%s5 + $0x20] sm:$0xff]
    %v341 = vld [vmem:[%s5 + $0x28] sm:$0xff]
    %v342 = vld [vmem:[%s5 + $0x30] sm:$0xff]
    %v343 = vld [vmem:[%s5 + $0x38] sm:$0xff]
    %v344 = vld [vmem:[%s6] sm:$0x1]
    %v346 = vlaneseq
    %v347 = vshrl.u32 %v346, 7
    %v348 = vsub.s32 0, %v347
    %v349 = vrot.slane %v344, %v348
    %v352 = vsel %vm252, %v334, 0
    %v355 = vsel %vm252, %v335, 0
    %357 = vmatprep.subr.mxu0 0.0
    %358 = vmatpush1.msra.mxu0 0.0
    %359 = vmatprep.subr.mxu0 0.0
    %360 = vmatpush1.msra.mxu0 0.0
    %361 = vmatprep.subr.mxu0 0.0
    %362 = vmatpush1.msra.mxu0 0.0
    %363 = vmatprep.subr.mxu0 0.0
    %364 = vmatpush1.msra.mxu0 0.0
    %365 = vmatprep.subr.mxu0 0.0
    %366 = vmatpush1.msra.mxu0 0.0
    %367 = vmatprep.subr.mxu0 0.0
    %368 = vmatpush1.msra.mxu0 0.0
    %369 = vmatprep.subr.mxu0 0.0
    %370 = vmatpush1.msra.mxu0 0.0
    %371 = vmatprep.subr.mxu0 0.0
    %372 = vmatpush1.msra.mxu0 0.0
    %373 = vmatprep.subr.mxu0 0.0
    %374 = vmatpush1.msra.mxu0 %v343
    %375 = vmatprep.subr.mxu0 0.0
    %376 = vmatpush1.msra.mxu0 %v342
    %377 = vmatprep.subr.mxu0 0.0
    %378 = vmatpush1.msra.mxu0 %v341
    %379 = vmatprep.subr.mxu0 0.0
    %380 = vmatpush1.msra.mxu0 %v340
    %381 = vmatprep.subr.mxu0 0.0
    %382 = vmatpush1.msra.mxu0 %v339
    %383 = vmatprep.subr.mxu0 0.0
    %384 = vmatpush1.msra.mxu0 %v338
    %385 = vmatprep.subr.mxu0 0.0
    %386 = vmatpush1.msra.mxu0 %v337
    %387 = vmatprep.subr.mxu0 0.0
    %388 = vmatpush1.msra.mxu0 %v336
    %389 = vmatprep.subr.mxu0 0.0
    %390 = vmatpush2.msra.mxu0 0.0
    %391 = vmatprep.subr.mxu0 0.0
    %392 = vmatpush2.msra.mxu0 0.0
    %393 = vmatprep.subr.mxu0 0.0
    %394 = vmatpush2.msra.mxu0 0.0
    %395 = vmatprep.subr.mxu0 0.0
    %396 = vmatpush2.msra.mxu0 0.0
    %397 = vmatprep.subr.mxu0 0.0
    %398 = vmatpush2.msra.mxu0 0.0
    %399 = vmatprep.subr.mxu0 0.0
    %400 = vmatpush2.msra.mxu0 0.0
    %401 = vmatprep.subr.mxu0 0.0
    %402 = vmatpush2.msra.mxu0 0.0
    %403 = vmatprep.subr.mxu0 0.0
    %404 = vmatpush2.msra.mxu0 0.0
    %405 = vmatprep.subr.mxu0 0.0
    %406 = vmatpush2.msra.mxu0 0.0
    %407 = vmatprep.subr.mxu0 0.0
    %408 = vmatpush2.msra.mxu0 0.0
    %409 = vmatprep.subr.mxu0 0.0
    %410 = vmatpush2.msra.mxu0 0.0
    %411 = vmatprep.subr.mxu0 0.0
    %412 = vmatpush2.msra.mxu0 0.0
    %413 = vmatprep.subr.mxu0 0.0
    %414 = vmatpush2.msra.mxu0 0.0
    %415 = vmatprep.subr.mxu0 0.0
    %416 = vmatpush2.msra.mxu0 0.0
    %417 = vmatprep.subr.mxu0 0.0
    %418 = vmatpush2.msra.mxu0 0.0
    %419 = vmatprep.subr.mxu0 0.0
    %420 = vmatpush2.msra.mxu0 0.0
    %421 = vmatprep.mubr.f32.mxu0 0.0
    %422 = vmatmul.mubr.f32.gmra.mxu0 %v352
    %v423 = vpop.f32.mrf.mxu0
    %v424 = vadd.f32 %v349, %v423
    %v425 = vpop.f32.mrf.mxu0
    %426 = vmatprep.mubr.f32.mxu0 0.0
    %427 = vmatmul.mubr.f32.gmra.mxu0 %v355
    %v428 = vpop.f32.mrf.mxu0
    %v429 = vadd.f32 %v349, %v428
    %v430 = vpop.f32.mrf.mxu0
    %431 = vdwg.mxu0
    %432 = vst [vmem:[#allocation2] sm:$0xff] %v424
    %433 = vst [vmem:[#allocation2 + $0x8] sm:$0xff] %v429
    // Predicated region
    $region30: #{tpu_custom_call.1} parent=1 // pred_check
      _
    $region31: #{tpu_custom_call.1} parent=1 // pred_check_branch
      %435 = sbr.rel (0) target = $region33
    $region32: #{tpu_custom_call.1} parent=1 // pred_region
      %s437 = ssub.s32 256, 256
      %438 = vsyncadd [#allocation3], %s437
      %s439 = sshll.u32 [#allocation2], 4
      %s440 = int_to_ptr.vmem [resolvable:$true] %s439
      %445 = dma.vmem_to_hbm [thread:$0]  %s440, 256, %s7, [#allocation3], 128, 128, 8
    $region33: #{tpu_custom_call.1} parent=1 // pred_fallthru
      _
    // Predicated region
    $region34: #{tpu_custom_call.1} parent=1 // pred_check
      _
    $region35: #{tpu_custom_call.1} parent=1 // pred_check_branch
      %447 = sbr.rel (0) target = $region37
    $region36: #{tpu_custom_call.1} parent=1 // pred_region
      %448 = dma.done [#allocation3], 256
    $region37: #{tpu_custom_call.1} parent=1 // pred_fallthru
      _
    %449 = vsyncpa [#allocation3], 1

</llo_original>
